<compile_context>
chip_gen: v7x
topology: tpu7x:2x2x1
jax: 0.10.0
libtpu: 0.0.40
codegen_flags: <defaults>
</compile_context>

<pallas_src>
import jax
import jax.numpy as jnp
from jax.experimental import pallas as pl
from jax.experimental.pallas import tpu as pltpu


_LANES = 128


# ---------------------------------------------------------------------------
# Fused kernel (one grid step == one decoder step)
# ---------------------------------------------------------------------------

def _make_decoder_kernel(num_layers, hidden_size, vocab_size, embed_size, batch):
    L, H, V, E, B = num_layers, hidden_size, vocab_size, embed_size, batch

    def kernel(tok_ref, h0_ref, c0_ref, emb_ref, *args):
        # args = (w_x_0..w_x_{L-1}, w_h_0..w_h_{L-1}, b_0..b_{L-1},
        #         fc_w, fc_b, pred_ref, h_ref, c_ref)
        ws_x = args[:L]
        ws_h = args[L:2 * L]
        bs = args[2 * L:3 * L]
        fc_w_ref = args[3 * L]
        fc_b_ref = args[3 * L + 1]
        pred_ref, h_ref, c_ref = args[3 * L + 2:]

        t = pl.program_id(0)

        # Load initial state into the VMEM-resident output buffers on the first step.
        # (Constant out block index => buffers stay resident across the grid and are
        #  written back to HBM only once, after the last step.)
        @pl.when(t == 0)
        def _():
            h_ref[...] = h0_ref[...]
            c_ref[...] = c0_ref[...]

        # ---- embedding gather: token scalars live in SMEM, O(B) dynamic row slices ----
        rows = []
        for b in range(B):
            tok = tok_ref[t * B + b]
            tok = jnp.clip(tok, 0, V - 1)            # jnp.take-style clamp for OOB tokens
            rows.append(emb_ref[pl.ds(tok, 1), :])   # (1, E) f32
        x = jnp.concatenate(rows, axis=0)            # (B, E) f32
        # dropout is identity in eval mode.

        layer_in = x.astype(jnp.bfloat16)
        for l in range(L):
            h_prev = h_ref[l]                        # (B, H) f32, VMEM-resident state
            c_prev = c_ref[l]

            # Two bf16 MXU passes (no lane-axis concat), f32 accumulation.
            gates = (jnp.dot(layer_in, ws_x[l][...],
                             preferred_element_type=jnp.float32)
                     + jnp.dot(h_prev.astype(jnp.bfloat16), ws_h[l][...],
                               preferred_element_type=jnp.float32)
                     + bs[l][...])                   # (B, 4H) f32

            # One transcendental for the whole 4H-wide gates vreg:
            #   sigmoid(x) = 0.5 * tanh(0.5 x) + 0.5 ; g-gate lanes stay plain tanh.
            lane = jax.lax.broadcasted_iota(jnp.int32, gates.shape, 1)
            is_g = (lane >= 2 * H) & (lane < 3 * H)
            th = jnp.tanh(jnp.where(is_g, gates, 0.5 * gates))
            act = jnp.where(is_g, th, 0.5 * th + 0.5)

            i_g = act[:, 0 * H:1 * H]
            f_g = act[:, 1 * H:2 * H]
            g_g = act[:, 2 * H:3 * H]
            o_g = act[:, 3 * H:4 * H]

            c_new = f_g * c_prev + i_g * g_g
            h_new = o_g * jnp.tanh(c_new)

            h_ref[l] = h_new                         # VMEM-resident carry
            c_ref[l] = c_new
            layer_in = h_new.astype(jnp.bfloat16)    # inter-layer dropout identity (eval)

        # ---- fc_out: lane-dense (B, 128) store for this step ----
        pred_ref[0] = (jnp.dot(layer_in, fc_w_ref[...],
                               preferred_element_type=jnp.float32)
                       + fc_b_ref[...])

    return kernel


# ---------------------------------------------------------------------------
# Wrappers
# ---------------------------------------------------------------------------

@jax.jit
def decoder_decode(params, tokens, hidden, cell):
    """Run T teacher-forced decoder steps in ONE pallas_call.

    tokens: (T, B) int32; hidden/cell: (L, B, H) float32.
    Returns (preds (T, B, V), hidden (L, B, H), cell (L, B, H)).
    """
    T, B = tokens.shape
    L, _, H = hidden.shape
    V, E = params["embedding"].shape
    P = params["fc_w"].shape[1]                      # padded (lane-dense) fc width

    kernel = _make_decoder_kernel(L, H, V, E, B)

    const2 = lambda t, tok: (0, 0)                   # weight-like: DMA'd once, VMEM-resident
    const3 = lambda t, tok: (0, 0, 0)

    in_specs = (
        [pl.BlockSpec((L, B, H), const3),            # initial hidden
         pl.BlockSpec((L, B, H), const3),            # initial cell
         pl.BlockSpec((V, E), const2)]               # embedding table
        + [pl.BlockSpec(w.shape, const2) for w in params["w_x"]]
        + [pl.BlockSpec(w.shape, const2) for w in params["w_h"]]
        + [pl.BlockSpec(b.shape, const2) for b in params["b"]]
        + [pl.BlockSpec(params["fc_w"].shape, const2),
           pl.BlockSpec(params["fc_b"].shape, const2)]
    )
    out_specs = (
        pl.BlockSpec((1, B, P), lambda t, tok: (t, 0, 0)),   # per-step prediction
        pl.BlockSpec((L, B, H), const3),                     # final hidden (resident carry)
        pl.BlockSpec((L, B, H), const3),                     # final cell   (resident carry)
    )

    # Advisory cost estimate for the whole fused call.
    flops = 0
    for l in range(L):
        in_l = E if l == 0 else H
        flops += 2 * B * (in_l + H) * 4 * H
    flops = T * (flops + 2 * B * H * P)
    transcendentals = T * L * B * 5 * H
    bytes_accessed = (
        sum(int(w.size) * w.dtype.itemsize for w in params["w_x"])
        + sum(int(w.size) * w.dtype.itemsize for w in params["w_h"])
        + sum(int(b.size) * 4 for b in params["b"])
        + int(params["embedding"].size) * 4
        + int(params["fc_w"].size) * params["fc_w"].dtype.itemsize
        + int(params["fc_b"].size) * 4
        + int(tokens.size) * 4
        + 2 * int(hidden.size) * 4 + 2 * int(cell.size) * 4
        + T * B * P * 4)

    pred_pad, h_new, c_new = pl.pallas_call(
        kernel,
        out_shape=(jax.ShapeDtypeStruct((T, B, P), jnp.float32),
                   jax.ShapeDtypeStruct((L, B, H), jnp.float32),
                   jax.ShapeDtypeStruct((L, B, H), jnp.float32)),
        grid_spec=pltpu.PrefetchScalarGridSpec(
            num_scalar_prefetch=1,                   # tokens -> SMEM
            grid=(T,),
            in_specs=in_specs,
            out_specs=out_specs),
        compiler_params=pltpu.CompilerParams(
            dimension_semantics=("arbitrary",)),     # sequential state carry over steps
        cost_estimate=pl.CostEstimate(flops=flops,
                                      transcendentals=transcendentals,
                                      bytes_accessed=bytes_accessed),
    )(tokens.reshape(-1).astype(jnp.int32), hidden, cell, params["embedding"],
      *params["w_x"], *params["w_h"], *params["b"],
      params["fc_w"], params["fc_b"])

    return pred_pad[:, :, :V], h_new, c_new


def decoder_forward(params, token, hidden, cell):
    """Single decoder step (== the PyTorch module's forward)."""
    preds, h_new, c_new = decoder_decode(params, token[None, :], hidden, cell)
    return preds[0], h_new, c_new


# ---------------------------------------------------------------------------
# Parameters
# ---------------------------------------------------------------------------

def init_decoder_params(key, output_size, embedding_size, hidden_size, num_layers):
    P = ((output_size + _LANES - 1) // _LANES) * _LANES
    keys = jax.random.split(key, 3 + 4 * num_layers)

    emb = 0.1 * jax.random.normal(keys[0], (output_size, embedding_size), jnp.float32)

    fc_w = 0.1 * jax.random.normal(keys[1], (hidden_size, output_size), jnp.float32)
    fc_b = 0.1 * jax.random.normal(keys[2], (1, output_size), jnp.float32)
    # Lane-dense (zero-padded) fc weights/bias; weights bf16 (MXU operand), bias f32.
    fc_w_pad = (jnp.zeros((hidden_size, P), jnp.float32)
                .at[:, :output_size].set(fc_w).astype(jnp.bfloat16))
    fc_b_pad = jnp.zeros((1, P), jnp.float32).at[:, :output_size].set(fc_b)

    ws_x, ws_h, bs = [], [], []
    for l in range(num_layers):
        in_size = embedding_size if l == 0 else hidden_size
        k0, k1, k2, k3 = keys[3 + 4 * l: 7 + 4 * l]
        w_ih_t = 0.1 * jax.random.normal(k0, (in_size, 4 * hidden_size), jnp.float32)
        w_hh_t = 0.1 * jax.random.normal(k1, (hidden_size, 4 * hidden_size), jnp.float32)
        b_ih = 0.1 * jax.random.normal(k2, (1, 4 * hidden_size), jnp.float32)
        b_hh = 0.1 * jax.random.normal(k3, (1, 4 * hidden_size), jnp.float32)
        # Stored separately (two MXU dots in-kernel, no lane concat), bf16 for half DMA.
        ws_x.append(w_ih_t.astype(jnp.bfloat16))
        ws_h.append(w_hh_t.astype(jnp.bfloat16))
        bs.append(b_ih + b_hh)

    return {"embedding": emb, "w_x": ws_x, "w_h": ws_h, "b": bs,
            "fc_w": fc_w_pad, "fc_b": fc_b_pad}


# ---------------------------------------------------------------------------
# Pure-JAX reference (same bf16 MXU operands, f32 math)
# ---------------------------------------------------------------------------

def decoder_step_ref(params, token, hidden, cell):
    V = params["embedding"].shape[0]
    H = hidden.shape[-1]
    tok = jnp.clip(token, 0, V - 1)
    x = jnp.take(params["embedding"], tok, axis=0)
    nh, nc = [], []
    layer_in = x
    for l in range(len(params["w_x"])):
        gates = (jnp.dot(layer_in.astype(jnp.bfloat16), params["w_x"][l],
                         preferred_element_type=jnp.float32)
                 + jnp.dot(hidden[l].astype(jnp.bfloat16), params["w_h"][l],
                           preferred_element_type=jnp.float32)
                 + params["b"][l])
        i = jax.nn.sigmoid(gates[:, :H])
        f = jax.nn.sigmoid(gates[:, H:2 * H])
        g = jnp.tanh(gates[:, 2 * H:3 * H])
        o = jax.nn.sigmoid(gates[:, 3 * H:])
        c_new = f * cell[l] + i * g
        h_new = o * jnp.tanh(c_new)
        nh.append(h_new)
        nc.append(c_new)
        layer_in = h_new
    pred = (jnp.dot(layer_in.astype(jnp.bfloat16), params["fc_w"],
                    preferred_element_type=jnp.float32) + params["fc_b"])[:, :V]
    return pred, jnp.stack(nh, 0), jnp.stack(nc, 0)


def decoder_decode_ref(params, tokens, hidden, cell):
    preds, h, c = [], hidden, cell
    for t in range(tokens.shape[0]):
        p, h, c = decoder_step_ref(params, tokens[t], h, c)
        preds.append(p)
    return jnp.stack(preds, 0), h, c


# ---------------------------------------------------------------------------
# Main
# ---------------------------------------------------------------------------

if __name__ == "__main__":
    output_size = 10      # vocab / target size
    embedding_size = 16
    hidden_size = 32
    num_layers = 2
    batch = 2
    T = 8                 # fused decode steps

    key = jax.random.PRNGKey(0)
    kp, kt, kh, kc = jax.random.split(key, 4)

    params = init_decoder_params(kp, output_size, embedding_size,
                                 hidden_size, num_layers)
    tokens = jax.random.randint(kt, (T, batch), 0, output_size, dtype=jnp.int32)
    hidden = jax.random.normal(kh, (num_layers, batch, hidden_size), jnp.float32)
    cell = jax.random.normal(kc, (num_layers, batch, hidden_size), jnp.float32)

    # ---- single step (module-equivalent forward) ----
    pred, h1, c1 = decoder_forward(params, tokens[0], hidden, cell)
    jax.block_until_ready((pred, h1, c1))
    pred_r, h1_r, c1_r = decoder_step_ref(params, tokens[0], hidden, cell)
    assert pred.shape == (batch, output_size)
    assert h1.shape == (num_layers, batch, hidden_size)
    assert c1.shape == (num_layers, batch, hidden_size)
    assert jnp.allclose(pred, pred_r, atol=1e-3, rtol=1e-3)
    assert jnp.allclose(h1, h1_r, atol=1e-3, rtol=1e-3)
    assert jnp.allclose(c1, c1_r, atol=1e-3, rtol=1e-3)

    # ---- fused T-step decode (one pallas_call; weights DMA'd once) ----
    preds, hT, cT = decoder_decode(params, tokens, hidden, cell)
    jax.block_until_ready((preds, hT, cT))
    preds_r, hT_r, cT_r = decoder_decode_ref(params, tokens, hidden, cell)
    assert preds.shape == (T, batch, output_size)
    assert jnp.allclose(preds, preds_r, atol=2e-3, rtol=2e-3)
    assert jnp.allclose(hT, hT_r, atol=2e-3, rtol=2e-3)
    assert jnp.allclose(cT, cT_r, atol=2e-3, rtol=2e-3)

    print("KERNEL_OK")
</pallas_src>

<mosaic_0001>
module attributes {stable_mosaic.version = 11 : i64} {
  func.func @kernel(%arg0: i32, %arg1: memref<2xi32, #tpu.memory_space<smem>>, %arg2: memref<2x2x32xf32, #tpu.memory_space<vmem>>, %arg3: memref<2x2x32xf32, #tpu.memory_space<vmem>>, %arg4: memref<10x16xf32, #tpu.memory_space<vmem>>, %arg5: memref<16x128xbf16, #tpu.memory_space<vmem>>, %arg6: memref<32x128xbf16, #tpu.memory_space<vmem>>, %arg7: memref<32x128xbf16, #tpu.memory_space<vmem>>, %arg8: memref<32x128xbf16, #tpu.memory_space<vmem>>, %arg9: memref<1x128xf32, #tpu.memory_space<vmem>>, %arg10: memref<1x128xf32, #tpu.memory_space<vmem>>, %arg11: memref<32x128xbf16, #tpu.memory_space<vmem>>, %arg12: memref<1x128xf32, #tpu.memory_space<vmem>>, %arg13: memref<1x2x128xf32, #tpu.memory_space<vmem>>, %arg14: memref<2x2x32xf32, #tpu.memory_space<vmem>>, %arg15: memref<2x2x32xf32, #tpu.memory_space<vmem>>) attributes {dimension_semantics = [#tpu.dimension_semantics<arbitrary>], iteration_bounds = array<i64: 1>, scalar_prefetch = 1 : i64, scratch_operands = 0 : i64, tpu.core_type = #tpu.core_type<tc>, window_params = [{pipeline_mode = #tpu.pipeline_mode<synchronous>, transform_indices = @transform_0, window_bounds = array<i64: 2, 2, 32>}, {pipeline_mode = #tpu.pipeline_mode<synchronous>, transform_indices = @transform_1, window_bounds = array<i64: 2, 2, 32>}, {pipeline_mode = #tpu.pipeline_mode<synchronous>, transform_indices = @transform_2, window_bounds = array<i64: 10, 16>}, {pipeline_mode = #tpu.pipeline_mode<synchronous>, transform_indices = @transform_3, window_bounds = array<i64: 16, 128>}, {pipeline_mode = #tpu.pipeline_mode<synchronous>, transform_indices = @transform_4, window_bounds = array<i64: 32, 128>}, {pipeline_mode = #tpu.pipeline_mode<synchronous>, transform_indices = @transform_5, window_bounds = array<i64: 32, 128>}, {pipeline_mode = #tpu.pipeline_mode<synchronous>, transform_indices = @transform_6, window_bounds = array<i64: 32, 128>}, {pipeline_mode = #tpu.pipeline_mode<synchronous>, transform_indices = @transform_7, window_bounds = array<i64: 1, 128>}, {pipeline_mode = #tpu.pipeline_mode<synchronous>, transform_indices = @transform_8, window_bounds = array<i64: 1, 128>}, {pipeline_mode = #tpu.pipeline_mode<synchronous>, transform_indices = @transform_9, window_bounds = array<i64: 32, 128>}, {pipeline_mode = #tpu.pipeline_mode<synchronous>, transform_indices = @transform_10, window_bounds = array<i64: 1, 128>}, {transform_indices = @transform_11, window_bounds = array<i64: 1, 2, 128>}, {pipeline_mode = #tpu.pipeline_mode<synchronous>, transform_indices = @transform_12, window_bounds = array<i64: 2, 2, 32>}, {pipeline_mode = #tpu.pipeline_mode<synchronous>, transform_indices = @transform_13, window_bounds = array<i64: 2, 2, 32>}]} {
    %c0_i32 = arith.constant 0 : i32
    %0 = arith.cmpi eq, %arg0, %c0_i32 : i32
    %1 = arith.extui %0 : i1 to i32
    %c0_i32_0 = arith.constant 0 : i32
    %2 = arith.cmpi ne, %1, %c0_i32_0 : i32
    scf.if %2 {
      %c0_61 = arith.constant 0 : index
      %c0_62 = arith.constant 0 : index
      %c0_63 = arith.constant 0 : index
      %117 = vector.load %arg2[%c0_61, %c0_62, %c0_63] : memref<2x2x32xf32, #tpu.memory_space<vmem>>, vector<2x2x32xf32>
      %c0_64 = arith.constant 0 : index
      %c0_65 = arith.constant 0 : index
      %c0_66 = arith.constant 0 : index
      %118 = vector.load %arg14[%c0_64, %c0_65, %c0_66] : memref<2x2x32xf32, #tpu.memory_space<vmem>>, vector<2x2x32xf32>
      tpu.vector_store %arg14[%c0_64, %c0_65, %c0_66], %117 {strides = array<i32>} : memref<2x2x32xf32, #tpu.memory_space<vmem>>, vector<2x2x32xf32>,
      %c0_67 = arith.constant 0 : index
      %c0_68 = arith.constant 0 : index
      %c0_69 = arith.constant 0 : index
      %119 = vector.load %arg3[%c0_67, %c0_68, %c0_69] : memref<2x2x32xf32, #tpu.memory_space<vmem>>, vector<2x2x32xf32>
      %c0_70 = arith.constant 0 : index
      %c0_71 = arith.constant 0 : index
      %c0_72 = arith.constant 0 : index
      %120 = vector.load %arg15[%c0_70, %c0_71, %c0_72] : memref<2x2x32xf32, #tpu.memory_space<vmem>>, vector<2x2x32xf32>
      tpu.vector_store %arg15[%c0_70, %c0_71, %c0_72], %119 {strides = array<i32>} : memref<2x2x32xf32, #tpu.memory_space<vmem>>, vector<2x2x32xf32>,
    } else {
    }
    %c2_i32 = arith.constant 2 : i32
    %3 = arith.muli %arg0, %c2_i32 : i32
    %c0_i32_1 = arith.constant 0 : i32
    %4 = arith.addi %3, %c0_i32_1 : i32
    %5 = arith.index_cast %4 : i32 to index
    %6 = memref.load %arg1[%5] : memref<2xi32, #tpu.memory_space<smem>>
    %c0_i32_2 = arith.constant 0 : i32
    %c9_i32 = arith.constant 9 : i32
    %7 = arith.maxsi %c0_i32_2, %6 : i32
    %8 = arith.minsi %c9_i32, %7 : i32
    %9 = arith.index_cast %8 : i32 to index
    %c0 = arith.constant 0 : index
    %10 = vector.load %arg4[%9, %c0] : memref<10x16xf32, #tpu.memory_space<vmem>>, vector<1x16xf32>
    %c2_i32_3 = arith.constant 2 : i32
    %11 = arith.muli %arg0, %c2_i32_3 : i32
    %c1_i32 = arith.constant 1 : i32
    %12 = arith.addi %11, %c1_i32 : i32
    %13 = arith.index_cast %12 : i32 to index
    %14 = memref.load %arg1[%13] : memref<2xi32, #tpu.memory_space<smem>>
    %c0_i32_4 = arith.constant 0 : i32
    %c9_i32_5 = arith.constant 9 : i32
    %15 = arith.maxsi %c0_i32_4, %14 : i32
    %16 = arith.minsi %c9_i32_5, %15 : i32
    %17 = arith.index_cast %16 : i32 to index
    %c0_6 = arith.constant 0 : index
    %18 = vector.load %arg4[%17, %c0_6] : memref<10x16xf32, #tpu.memory_space<vmem>>, vector<1x16xf32>
    %19 = tpu.concatenate %10, %18 in 0 : vector<1x16xf32>, vector<1x16xf32> -> vector<2x16xf32>
    %20 = arith.truncf %19 : vector<2x16xf32> to vector<2x16xbf16>
    %c0_7 = arith.constant 0 : index
    %c0_8 = arith.constant 0 : index
    %c0_9 = arith.constant 0 : index
    %21 = vector.load %arg14[%c0_7, %c0_8, %c0_9] : memref<2x2x32xf32, #tpu.memory_space<vmem>>, vector<1x2x32xf32>
    %22 = vector.shape_cast %21 : vector<1x2x32xf32> to vector<2x32xf32>
    %c0_10 = arith.constant 0 : index
    %c0_11 = arith.constant 0 : index
    %c0_12 = arith.constant 0 : index
    %23 = vector.load %arg15[%c0_10, %c0_11, %c0_12] : memref<2x2x32xf32, #tpu.memory_space<vmem>>, vector<1x2x32xf32>
    %24 = vector.shape_cast %23 : vector<1x2x32xf32> to vector<2x32xf32>
    %c0_13 = arith.constant 0 : index
    %c0_14 = arith.constant 0 : index
    %25 = vector.load %arg5[%c0_13, %c0_14] : memref<16x128xbf16, #tpu.memory_space<vmem>>, vector<16x128xbf16>
    %cst = arith.constant dense<0.000000e+00> : vector<2x128xf32>
    %26 = tpu.matmul %20, %25, %cst {dimension_numbers = #tpu.dot_dimension_numbers<[1], [0], [0], [1], [0, 0, 1, 1], [], []>} : vector<2x16xbf16>, vector<16x128xbf16>, vector<2x128xf32> -> vector<2x128xf32>
    %27 = arith.truncf %22 : vector<2x32xf32> to vector<2x32xbf16>
    %c0_15 = arith.constant 0 : index
    %c0_16 = arith.constant 0 : index
    %28 = vector.load %arg7[%c0_15, %c0_16] : memref<32x128xbf16, #tpu.memory_space<vmem>>, vector<32x128xbf16>
    %cst_17 = arith.constant dense<0.000000e+00> : vector<2x128xf32>
    %29 = tpu.matmul %27, %28, %cst_17 {dimension_numbers = #tpu.dot_dimension_numbers<[1], [0], [0], [1], [0, 0, 1, 1], [], []>} : vector<2x32xbf16>, vector<32x128xbf16>, vector<2x128xf32> -> vector<2x128xf32>
    %30 = arith.addf %26, %29 : vector<2x128xf32>
    %c0_18 = arith.constant 0 : index
    %c0_19 = arith.constant 0 : index
    %31 = vector.load %arg9[%c0_18, %c0_19] : memref<1x128xf32, #tpu.memory_space<vmem>>, vector<1x128xf32>
    %32 = vector.broadcast %31 : vector<1x128xf32> to vector<2x128xf32>
    %33 = arith.addf %30, %32 : vector<2x128xf32>
    %34 = tpu.iota {dimensions = array<i32: 1>} : vector<2x128xi32>
    %c64_i32 = arith.constant 64 : i32
    %35 = vector.broadcast %c64_i32 : i32 to vector<2x128xi32>
    %36 = arith.cmpi sge, %34, %35 : vector<2x128xi32>
    %c96_i32 = arith.constant 96 : i32
    %37 = vector.broadcast %c96_i32 : i32 to vector<2x128xi32>
    %38 = arith.cmpi slt, %34, %37 : vector<2x128xi32>
    %39 = arith.andi %36, %38 : vector<2x128xi1>
    %cst_20 = arith.constant 5.000000e-01 : f32
    %40 = vector.broadcast %cst_20 : f32 to vector<2x128xf32>
    %41 = arith.mulf %40, %33 : vector<2x128xf32>
    %42 = arith.select %39, %33, %41 : vector<2x128xi1>, vector<2x128xf32>
    %43 = math.tanh %42 : vector<2x128xf32>
    %cst_21 = arith.constant 5.000000e-01 : f32
    %44 = vector.broadcast %cst_21 : f32 to vector<2x128xf32>
    %45 = arith.mulf %44, %43 : vector<2x128xf32>
    %cst_22 = arith.constant 5.000000e-01 : f32
    %46 = vector.broadcast %cst_22 : f32 to vector<2x128xf32>
    %47 = arith.addf %45, %46 : vector<2x128xf32>
    %48 = arith.select %39, %43, %47 : vector<2x128xi1>, vector<2x128xf32>
    %49 = vector.extract_strided_slice %48 {offsets = [0, 0], sizes = [2, 32], strides = [1, 1]} : vector<2x128xf32> to vector<2x32xf32>
    %50 = vector.extract_strided_slice %48 {offsets = [0, 32], sizes = [2, 32], strides = [1, 1]} : vector<2x128xf32> to vector<2x32xf32>
    %51 = vector.extract_strided_slice %48 {offsets = [0, 64], sizes = [2, 32], strides = [1, 1]} : vector<2x128xf32> to vector<2x32xf32>
    %52 = vector.extract_strided_slice %48 {offsets = [0, 96], sizes = [2, 32], strides = [1, 1]} : vector<2x128xf32> to vector<2x32xf32>
    %53 = arith.mulf %50, %24 : vector<2x32xf32>
    %54 = arith.mulf %49, %51 : vector<2x32xf32>
    %55 = arith.addf %53, %54 : vector<2x32xf32>
    %56 = math.tanh %55 : vector<2x32xf32>
    %57 = arith.mulf %52, %56 : vector<2x32xf32>
    %c0_23 = arith.constant 0 : index
    %c0_24 = arith.constant 0 : index
    %c0_25 = arith.constant 0 : index
    %58 = vector.load %arg14[%c0_23, %c0_24, %c0_25] : memref<2x2x32xf32, #tpu.memory_space<vmem>>, vector<1x2x32xf32>
    %59 = vector.shape_cast %58 : vector<1x2x32xf32> to vector<2x32xf32>
    %60 = vector.shape_cast %57 : vector<2x32xf32> to vector<1x2x32xf32>
    tpu.vector_store %arg14[%c0_23, %c0_24, %c0_25], %60 {strides = array<i32>} : memref<2x2x32xf32, #tpu.memory_space<vmem>>, vector<1x2x32xf32>,
    %c0_26 = arith.constant 0 : index
    %c0_27 = arith.constant 0 : index
    %c0_28 = arith.constant 0 : index
    %61 = vector.load %arg15[%c0_26, %c0_27, %c0_28] : memref<2x2x32xf32, #tpu.memory_space<vmem>>, vector<1x2x32xf32>
    %62 = vector.shape_cast %61 : vector<1x2x32xf32> to vector<2x32xf32>
    %63 = vector.shape_cast %55 : vector<2x32xf32> to vector<1x2x32xf32>
    tpu.vector_store %arg15[%c0_26, %c0_27, %c0_28], %63 {strides = array<i32>} : memref<2x2x32xf32, #tpu.memory_space<vmem>>, vector<1x2x32xf32>,
    %64 = arith.truncf %57 : vector<2x32xf32> to vector<2x32xbf16>
    %c1 = arith.constant 1 : index
    %c0_29 = arith.constant 0 : index
    %c0_30 = arith.constant 0 : index
    %65 = vector.load %arg14[%c1, %c0_29, %c0_30] : memref<2x2x32xf32, #tpu.memory_space<vmem>>, vector<1x2x32xf32>
    %66 = vector.shape_cast %65 : vector<1x2x32xf32> to vector<2x32xf32>
    %c1_31 = arith.constant 1 : index
    %c0_32 = arith.constant 0 : index
    %c0_33 = arith.constant 0 : index
    %67 = vector.load %arg15[%c1_31, %c0_32, %c0_33] : memref<2x2x32xf32, #tpu.memory_space<vmem>>, vector<1x2x32xf32>
    %68 = vector.shape_cast %67 : vector<1x2x32xf32> to vector<2x32xf32>
    %c0_34 = arith.constant 0 : index
    %c0_35 = arith.constant 0 : index
    %69 = vector.load %arg6[%c0_34, %c0_35] : memref<32x128xbf16, #tpu.memory_space<vmem>>, vector<32x128xbf16>
    %cst_36 = arith.constant dense<0.000000e+00> : vector<2x128xf32>
    %70 = tpu.matmul %64, %69, %cst_36 {dimension_numbers = #tpu.dot_dimension_numbers<[1], [0], [0], [1], [0, 0, 1, 1], [], []>} : vector<2x32xbf16>, vector<32x128xbf16>, vector<2x128xf32> -> vector<2x128xf32>
    %71 = arith.truncf %66 : vector<2x32xf32> to vector<2x32xbf16>
    %c0_37 = arith.constant 0 : index
    %c0_38 = arith.constant 0 : index
    %72 = vector.load %arg8[%c0_37, %c0_38] : memref<32x128xbf16, #tpu.memory_space<vmem>>, vector<32x128xbf16>
    %cst_39 = arith.constant dense<0.000000e+00> : vector<2x128xf32>
    %73 = tpu.matmul %71, %72, %cst_39 {dimension_numbers = #tpu.dot_dimension_numbers<[1], [0], [0], [1], [0, 0, 1, 1], [], []>} : vector<2x32xbf16>, vector<32x128xbf16>, vector<2x128xf32> -> vector<2x128xf32>
    %74 = arith.addf %70, %73 : vector<2x128xf32>
    %c0_40 = arith.constant 0 : index
    %c0_41 = arith.constant 0 : index
    %75 = vector.load %arg10[%c0_40, %c0_41] : memref<1x128xf32, #tpu.memory_space<vmem>>, vector<1x128xf32>
    %76 = vector.broadcast %75 : vector<1x128xf32> to vector<2x128xf32>
    %77 = arith.addf %74, %76 : vector<2x128xf32>
    %78 = tpu.iota {dimensions = array<i32: 1>} : vector<2x128xi32>
    %c64_i32_42 = arith.constant 64 : i32
    %79 = vector.broadcast %c64_i32_42 : i32 to vector<2x128xi32>
    %80 = arith.cmpi sge, %78, %79 : vector<2x128xi32>
    %c96_i32_43 = arith.constant 96 : i32
    %81 = vector.broadcast %c96_i32_43 : i32 to vector<2x128xi32>
    %82 = arith.cmpi slt, %78, %81 : vector<2x128xi32>
    %83 = arith.andi %80, %82 : vector<2x128xi1>
    %cst_44 = arith.constant 5.000000e-01 : f32
    %84 = vector.broadcast %cst_44 : f32 to vector<2x128xf32>
    %85 = arith.mulf %84, %77 : vector<2x128xf32>
    %86 = arith.select %83, %77, %85 : vector<2x128xi1>, vector<2x128xf32>
    %87 = math.tanh %86 : vector<2x128xf32>
    %cst_45 = arith.constant 5.000000e-01 : f32
    %88 = vector.broadcast %cst_45 : f32 to vector<2x128xf32>
    %89 = arith.mulf %88, %87 : vector<2x128xf32>
    %cst_46 = arith.constant 5.000000e-01 : f32
    %90 = vector.broadcast %cst_46 : f32 to vector<2x128xf32>
    %91 = arith.addf %89, %90 : vector<2x128xf32>
    %92 = arith.select %83, %87, %91 : vector<2x128xi1>, vector<2x128xf32>
    %93 = vector.extract_strided_slice %92 {offsets = [0, 0], sizes = [2, 32], strides = [1, 1]} : vector<2x128xf32> to vector<2x32xf32>
    %94 = vector.extract_strided_slice %92 {offsets = [0, 32], sizes = [2, 32], strides = [1, 1]} : vector<2x128xf32> to vector<2x32xf32>
    %95 = vector.extract_strided_slice %92 {offsets = [0, 64], sizes = [2, 32], strides = [1, 1]} : vector<2x128xf32> to vector<2x32xf32>
    %96 = vector.extract_strided_slice %92 {offsets = [0, 96], sizes = [2, 32], strides = [1, 1]} : vector<2x128xf32> to vector<2x32xf32>
    %97 = arith.mulf %94, %68 : vector<2x32xf32>
    %98 = arith.mulf %93, %95 : vector<2x32xf32>
    %99 = arith.addf %97, %98 : vector<2x32xf32>
    %100 = math.tanh %99 : vector<2x32xf32>
    %101 = arith.mulf %96, %100 : vector<2x32xf32>
    %c1_47 = arith.constant 1 : index
    %c0_48 = arith.constant 0 : index
    %c0_49 = arith.constant 0 : index
    %102 = vector.load %arg14[%c1_47, %c0_48, %c0_49] : memref<2x2x32xf32, #tpu.memory_space<vmem>>, vector<1x2x32xf32>
    %103 = vector.shape_cast %102 : vector<1x2x32xf32> to vector<2x32xf32>
    %104 = vector.shape_cast %101 : vector<2x32xf32> to vector<1x2x32xf32>
    tpu.vector_store %arg14[%c1_47, %c0_48, %c0_49], %104 {strides = array<i32>} : memref<2x2x32xf32, #tpu.memory_space<vmem>>, vector<1x2x32xf32>,
    %c1_50 = arith.constant 1 : index
    %c0_51 = arith.constant 0 : index
    %c0_52 = arith.constant 0 : index
    %105 = vector.load %arg15[%c1_50, %c0_51, %c0_52] : memref<2x2x32xf32, #tpu.memory_space<vmem>>, vector<1x2x32xf32>
    %106 = vector.shape_cast %105 : vector<1x2x32xf32> to vector<2x32xf32>
    %107 = vector.shape_cast %99 : vector<2x32xf32> to vector<1x2x32xf32>
    tpu.vector_store %arg15[%c1_50, %c0_51, %c0_52], %107 {strides = array<i32>} : memref<2x2x32xf32, #tpu.memory_space<vmem>>, vector<1x2x32xf32>,
    %108 = arith.truncf %101 : vector<2x32xf32> to vector<2x32xbf16>
    %c0_53 = arith.constant 0 : index
    %c0_54 = arith.constant 0 : index
    %109 = vector.load %arg11[%c0_53, %c0_54] : memref<32x128xbf16, #tpu.memory_space<vmem>>, vector<32x128xbf16>
    %cst_55 = arith.constant dense<0.000000e+00> : vector<2x128xf32>
    %110 = tpu.matmul %108, %109, %cst_55 {dimension_numbers = #tpu.dot_dimension_numbers<[1], [0], [0], [1], [0, 0, 1, 1], [], []>} : vector<2x32xbf16>, vector<32x128xbf16>, vector<2x128xf32> -> vector<2x128xf32>
    %c0_56 = arith.constant 0 : index
    %c0_57 = arith.constant 0 : index
    %111 = vector.load %arg12[%c0_56, %c0_57] : memref<1x128xf32, #tpu.memory_space<vmem>>, vector<1x128xf32>
    %112 = vector.broadcast %111 : vector<1x128xf32> to vector<2x128xf32>
    %113 = arith.addf %110, %112 : vector<2x128xf32>
    %c0_58 = arith.constant 0 : index
    %c0_59 = arith.constant 0 : index
    %c0_60 = arith.constant 0 : index
    %114 = vector.load %arg13[%c0_58, %c0_59, %c0_60] : memref<1x2x128xf32, #tpu.memory_space<vmem>>, vector<1x2x128xf32>
    %115 = vector.shape_cast %114 : vector<1x2x128xf32> to vector<2x128xf32>
    %116 = vector.shape_cast %113 : vector<2x128xf32> to vector<1x2x128xf32>
    tpu.vector_store %arg13[%c0_58, %c0_59, %c0_60], %116 {strides = array<i32>} : memref<1x2x128xf32, #tpu.memory_space<vmem>>, vector<1x2x128xf32>,
    return
  }
  func.func @transform_0(%arg0: i32, %arg1: memref<2xi32, #tpu.memory_space<smem>>) -> (i32, i32, i32) {
    %c0_i32 = arith.constant 0 : i32
    %c0_i32_0 = arith.constant 0 : i32
    %c0_i32_1 = arith.constant 0 : i32
    %c0_i32_2 = arith.constant 0 : i32
    return %c0_i32, %c0_i32_0, %c0_i32_1 : i32, i32, i32
  }
  func.func @transform_1(%arg0: i32, %arg1: memref<2xi32, #tpu.memory_space<smem>>) -> (i32, i32, i32) {
    %c0_i32 = arith.constant 0 : i32
    %c0_i32_0 = arith.constant 0 : i32
    %c0_i32_1 = arith.constant 0 : i32
    %c0_i32_2 = arith.constant 0 : i32
    return %c0_i32, %c0_i32_0, %c0_i32_1 : i32, i32, i32
  }
  func.func @transform_2(%arg0: i32, %arg1: memref<2xi32, #tpu.memory_space<smem>>) -> (i32, i32) {
    %c0_i32 = arith.constant 0 : i32
    %c0_i32_0 = arith.constant 0 : i32
    %c0_i32_1 = arith.constant 0 : i32
    return %c0_i32, %c0_i32_0 : i32, i32
  }
  func.func @transform_3(%arg0: i32, %arg1: memref<2xi32, #tpu.memory_space<smem>>) -> (i32, i32) {
    %c0_i32 = arith.constant 0 : i32
    %c0_i32_0 = arith.constant 0 : i32
    %c0_i32_1 = arith.constant 0 : i32
    return %c0_i32, %c0_i32_0 : i32, i32
  }
  func.func @transform_4(%arg0: i32, %arg1: memref<2xi32, #tpu.memory_space<smem>>) -> (i32, i32) {
    %c0_i32 = arith.constant 0 : i32
    %c0_i32_0 = arith.constant 0 : i32
    %c0_i32_1 = arith.constant 0 : i32
    return %c0_i32, %c0_i32_0 : i32, i32
  }
  func.func @transform_5(%arg0: i32, %arg1: memref<2xi32, #tpu.memory_space<smem>>) -> (i32, i32) {
    %c0_i32 = arith.constant 0 : i32
    %c0_i32_0 = arith.constant 0 : i32
    %c0_i32_1 = arith.constant 0 : i32
    return %c0_i32, %c0_i32_0 : i32, i32
  }
  func.func @transform_6(%arg0: i32, %arg1: memref<2xi32, #tpu.memory_space<smem>>) -> (i32, i32) {
    %c0_i32 = arith.constant 0 : i32
    %c0_i32_0 = arith.constant 0 : i32
    %c0_i32_1 = arith.constant 0 : i32
    return %c0_i32, %c0_i32_0 : i32, i32
  }
  func.func @transform_7(%arg0: i32, %arg1: memref<2xi32, #tpu.memory_space<smem>>) -> (i32, i32) {
    %c0_i32 = arith.constant 0 : i32
    %c0_i32_0 = arith.constant 0 : i32
    %c0_i32_1 = arith.constant 0 : i32
    return %c0_i32, %c0_i32_0 : i32, i32
  }
  func.func @transform_8(%arg0: i32, %arg1: memref<2xi32, #tpu.memory_space<smem>>) -> (i32, i32) {
    %c0_i32 = arith.constant 0 : i32
    %c0_i32_0 = arith.constant 0 : i32
    %c0_i32_1 = arith.constant 0 : i32
    return %c0_i32, %c0_i32_0 : i32, i32
  }
  func.func @transform_9(%arg0: i32, %arg1: memref<2xi32, #tpu.memory_space<smem>>) -> (i32, i32) {
    %c0_i32 = arith.constant 0 : i32
    %c0_i32_0 = arith.constant 0 : i32
    %c0_i32_1 = arith.constant 0 : i32
    return %c0_i32, %c0_i32_0 : i32, i32
  }
  func.func @transform_10(%arg0: i32, %arg1: memref<2xi32, #tpu.memory_space<smem>>) -> (i32, i32) {
    %c0_i32 = arith.constant 0 : i32
    %c0_i32_0 = arith.constant 0 : i32
    %c0_i32_1 = arith.constant 0 : i32
    return %c0_i32, %c0_i32_0 : i32, i32
  }
  func.func @transform_11(%arg0: i32, %arg1: memref<2xi32, #tpu.memory_space<smem>>) -> (i32, i32, i32) {
    %c0_i32 = arith.constant 0 : i32
    %c0_i32_0 = arith.constant 0 : i32
    %c0_i32_1 = arith.constant 0 : i32
    return %arg0, %c0_i32, %c0_i32_0 : i32, i32, i32
  }
  func.func @transform_12(%arg0: i32, %arg1: memref<2xi32, #tpu.memory_space<smem>>) -> (i32, i32, i32) {
    %c0_i32 = arith.constant 0 : i32
    %c0_i32_0 = arith.constant 0 : i32
    %c0_i32_1 = arith.constant 0 : i32
    %c0_i32_2 = arith.constant 0 : i32
    return %c0_i32, %c0_i32_0, %c0_i32_1 : i32, i32, i32
  }
  func.func @transform_13(%arg0: i32, %arg1: memref<2xi32, #tpu.memory_space<smem>>) -> (i32, i32, i32) {
    %c0_i32 = arith.constant 0 : i32
    %c0_i32_0 = arith.constant 0 : i32
    %c0_i32_1 = arith.constant 0 : i32
    %c0_i32_2 = arith.constant 0 : i32
    return %c0_i32, %c0_i32_0, %c0_i32_1 : i32, i32, i32
  }
}

</mosaic_0001>

<llo_original>
// kernel: decoder_decode.1
$region0: #{decoder_decode.1}
  #allocation0 [shape = 'u32[]', space=smem, size = 0x4, offset = 0x4, fixed_abs, tag = 'smem constant byte address 0x4 - core index']
  #allocation1 [shape = 'u32[144,128]{1,0:T(1,128)}', space=vmem, size = 0x12000, scoped, tag = 'internal scratch']
  #allocation2 [shape = 's32[1]{0}', space=sflag, size = 0x4, scoped, tag = 'scoped memory for decoder_decode.1']
  #allocation3 [shape = 'u8[512]{0}', space=smem, size = 0x200, scoped, tag = 'prefetched SMEM operand 0']
  %s0 = inlined_call_operand.vmem [shape: s32[2], index: 0, kind: input, shape index: {}]
  %s1 = inlined_call_operand.vmem [shape: f32[2,2,32], index: 1, kind: input, shape index: {}]
  %s2 = inlined_call_operand.vmem [shape: f32[2,2,32], index: 2, kind: input, shape index: {}]
  %s3 = inlined_call_operand.hbm [shape: f32[10,16], index: 3, kind: input, shape index: {}]
  %s4 = inlined_call_operand.vmem [shape: bf16[16,128], index: 4, kind: input, shape index: {}]
  %s5 = inlined_call_operand.vmem [shape: bf16[32,128], index: 5, kind: input, shape index: {}]
  %s6 = inlined_call_operand.hbm [shape: bf16[32,128], index: 6, kind: input, shape index: {}]
  %s7 = inlined_call_operand.hbm [shape: bf16[32,128], index: 7, kind: input, shape index: {}]
  %s8 = inlined_call_operand.vmem [shape: f32[1,128], index: 8, kind: input, shape index: {}]
  %s9 = inlined_call_operand.hbm [shape: f32[1,128], index: 9, kind: input, shape index: {}]
  %s10 = inlined_call_operand.hbm [shape: bf16[32,128], index: 10, kind: input, shape index: {}]
  %s11 = inlined_call_operand.hbm [shape: f32[1,128], index: 11, kind: input, shape index: {}]
  %s12 = inlined_call_operand.hbm [shape: f32[1,2,128], index: 12, kind: output, shape index: {0}]
  %s13 = inlined_call_operand.hbm [shape: f32[2,2,32], index: 13, kind: output, shape index: {1}]
  %s14 = inlined_call_operand.hbm [shape: f32[2,2,32], index: 14, kind: output, shape index: {2}]
  %15 = xla_tuple %s12, %s13, %s14
  %s16 = sld [smem:[#allocation0]]
  $region98: #{decoder_decode.1} parent=0
    _
  %s18 = ssub.s32 1, %s16
  %s19 = scalar_select 0, %s18, %s16
  %s20 = sshll.u32 %s0, 4
  %s21 = int_to_ptr.vmem [resolvable:$true] %s20
  %23 = dma.vmem_to_smem %s21, 16, [#allocation3], [#allocation2]
  %24 = dma.done [#allocation2], 16
  %25 = sfence
  $region1: #{decoder_decode.1} parent=0
    #allocation4 [shape = 'u8[8192]{0}', space=vmem, size = 0x2000, scoped, tag = 'input window, operand 3, single buffered']
    #allocation5 [shape = 's32[1]{0}', space=sflag, size = 0x4, scoped, tag = 'scoped memory for decoder_decode.1']
    #allocation6 [shape = 's32[1]{0}', space=sflag, size = 0x4, scoped, tag = 'scoped memory for decoder_decode.1']
    #allocation7 [shape = 'u8[8192]{0}', space=vmem, size = 0x2000, scoped, tag = 'input window, operand 6, single buffered']
    #allocation8 [shape = 's32[1]{0}', space=sflag, size = 0x4, scoped, tag = 'scoped memory for decoder_decode.1']
    #allocation9 [shape = 'u8[8192]{0}', space=vmem, size = 0x2000, scoped, tag = 'input window, operand 7, single buffered']
    #allocation10 [shape = 'u8[512]{0}', space=vmem, size = 0x400, scoped, tag = 'input window, operand 9, single buffered']
    #allocation11 [shape = 's32[1]{0}', space=sflag, size = 0x4, scoped, tag = 'scoped memory for decoder_decode.1']
    #allocation12 [shape = 'u8[8192]{0}', space=vmem, size = 0x2000, scoped, tag = 'input window, operand 10, single buffered']
    #allocation13 [shape = 'u8[512]{0}', space=vmem, size = 0x400, scoped, tag = 'input window, operand 11, single buffered']
    #allocation14 [shape = 's32[1]{0}', space=sflag, size = 0x4, scoped, tag = 'scoped memory for decoder_decode.1']
    #allocation15 [shape = 'u8[1024]{0}', space=vmem, size = 0x400, scoped, tag = 'output window, operand 0, single buffered']
    #allocation16 [shape = 'u8[2048]{0}', space=vmem, size = 0x800, scoped, tag = 'output window, operand 1, single buffered']
    #allocation17 [shape = 's32[1]{0}', space=sflag, size = 0x4, scoped, tag = 'scoped memory for decoder_decode.1']
    #allocation18 [shape = 'u8[2048]{0}', space=vmem, size = 0x800, scoped, tag = 'output window, operand 2, single buffered']
    %26 = vsyncpa [#allocation5], 0
    %27 = vsyncpa [#allocation8], 0
    %28 = vsyncpa [#allocation11], 0
    %29 = vsyncpa [#allocation14], 0
    %30 = vsyncpa [#allocation6], 0
    %31 = vsyncpa [#allocation17], 0
    // Predicated region
    $region2: #{decoder_decode.1} parent=1 // pred_check
      _
    $region3: #{decoder_decode.1} parent=1 // pred_check_branch
      %33 = sbr.rel (0) target = $region5
    $region4: #{decoder_decode.1} parent=1 // pred_region
      _
    $region5: #{decoder_decode.1} parent=1 // pred_fallthru
      _
    // Predicated region
    $region6: #{decoder_decode.1} parent=1 // pred_check
      _
    $region7: #{decoder_decode.1} parent=1 // pred_check_branch
      %35 = sbr.rel (0) target = $region9
    $region8: #{decoder_decode.1} parent=1 // pred_region
      _
    $region9: #{decoder_decode.1} parent=1 // pred_fallthru
      _
    // Predicated region
    $region10: #{decoder_decode.1} parent=1 // pred_check
      _
    $region11: #{decoder_decode.1} parent=1 // pred_check_branch
      %37 = sbr.rel (0) target = $region13
    $region12: #{decoder_decode.1} parent=1 // pred_region
      %s39 = ssub.s32 256, 256
      %40 = vsyncadd [#allocation5], %s39
      %s41 = sshll.u32 [#allocation4], 4
      %s42 = int_to_ptr.vmem [resolvable:$true] %s41
      %47 = dma.hbm_to_vmem [thread:$0]  %s3, 256, %s42, [#allocation5], 128, 128, 8
    $region13: #{decoder_decode.1} parent=1 // pred_fallthru
      _
    // Predicated region
    $region14: #{decoder_decode.1} parent=1 // pred_check
      _
    $region15: #{decoder_decode.1} parent=1 // pred_check_branch
      %49 = sbr.rel (0) target = $region17
    $region16: #{decoder_decode.1} parent=1 // pred_region
      _
    $region17: #{decoder_decode.1} parent=1 // pred_fallthru
      _
    // Predicated region
    $region18: #{decoder_decode.1} parent=1 // pred_check
      _
    $region19: #{decoder_decode.1} parent=1 // pred_check_branch
      %51 = sbr.rel (0) target = $region21
    $region20: #{decoder_decode.1} parent=1 // pred_region
      _
    $region21: #{decoder_decode.1} parent=1 // pred_fallthru
      _
    // Predicated region
    $region22: #{decoder_decode.1} parent=1 // pred_check
      _
    $region23: #{decoder_decode.1} parent=1 // pred_check_branch
      %53 = sbr.rel (0) target = $region25
    $region24: #{decoder_decode.1} parent=1 // pred_region
      %s55 = ssub.s32 256, 256
      %56 = vsyncadd [#allocation8], %s55
      %s57 = sshll.u32 [#allocation7], 4
      %s58 = int_to_ptr.vmem [resolvable:$true] %s57
      %63 = dma.hbm_to_vmem [thread:$0]  %s6, 256, %s58, [#allocation8], 64, 64, 4
    $region25: #{decoder_decode.1} parent=1 // pred_fallthru
      _
    // Predicated region
    $region26: #{decoder_decode.1} parent=1 // pred_check
      _
    $region27: #{decoder_decode.1} parent=1 // pred_check_branch
      %65 = sbr.rel (0) target = $region29
    $region28: #{decoder_decode.1} parent=1 // pred_region
      %s67 = ssub.s32 256, 256
      %68 = vsyncadd [#allocation8], %s67
      %s69 = sshll.u32 [#allocation9], 4
      %s70 = int_to_ptr.vmem [resolvable:$true] %s69
      %75 = dma.hbm_to_vmem [thread:$0]  %s7, 256, %s70, [#allocation8], 64, 64, 4
    $region29: #{decoder_decode.1} parent=1 // pred_fallthru
      _
    // Predicated region
    $region30: #{decoder_decode.1} parent=1 // pred_check
      _
    $region31: #{decoder_decode.1} parent=1 // pred_check_branch
      %77 = sbr.rel (0) target = $region33
    $region32: #{decoder_decode.1} parent=1 // pred_region
      _
    $region33: #{decoder_decode.1} parent=1 // pred_fallthru
      _
    // Predicated region
    $region34: #{decoder_decode.1} parent=1 // pred_check
      _
    $region35: #{decoder_decode.1} parent=1 // pred_check_branch
      %79 = sbr.rel (0) target = $region37
    $region36: #{decoder_decode.1} parent=1 // pred_region
      %s81 = ssub.s32 16, 16
      %82 = vsyncadd [#allocation11], %s81
      %s84 = sshll.u32 [#allocation10], 4
      %s85 = int_to_ptr.vmem [resolvable:$true] %s84
      %87 = dma.hbm_to_vmem [thread:$0]  %s9, 16, %s85, [#allocation11]
    $region37: #{decoder_decode.1} parent=1 // pred_fallthru
      _
    // Predicated region
    $region38: #{decoder_decode.1} parent=1 // pred_check
      _
    $region39: #{decoder_decode.1} parent=1 // pred_check_branch
      %89 = sbr.rel (0) target = $region41
    $region40: #{decoder_decode.1} parent=1 // pred_region
      %s91 = ssub.s32 256, 256
      %92 = vsyncadd [#allocation11], %s91
      %s93 = sshll.u32 [#allocation12], 4
      %s94 = int_to_ptr.vmem [resolvable:$true] %s93
      %99 = dma.hbm_to_vmem [thread:$0]  %s10, 256, %s94, [#allocation11], 64, 64, 4
    $region41: #{decoder_decode.1} parent=1 // pred_fallthru
      _
    // Predicated region
    $region42: #{decoder_decode.1} parent=1 // pred_check
      _
    $region43: #{decoder_decode.1} parent=1 // pred_check_branch
      %101 = sbr.rel (0) target = $region45
    $region44: #{decoder_decode.1} parent=1 // pred_region
      %s103 = ssub.s32 16, 16
      %104 = vsyncadd [#allocation14], %s103
      %s106 = sshll.u32 [#allocation13], 4
      %s107 = int_to_ptr.vmem [resolvable:$true] %s106
      %109 = dma.hbm_to_vmem [thread:$0]  %s11, 16, %s107, [#allocation14]
    $region45: #{decoder_decode.1} parent=1 // pred_fallthru
      _
    // Predicated region
    $region46: #{decoder_decode.1} parent=1 // pred_check
      _
    $region47: #{decoder_decode.1} parent=1 // pred_check_branch
      %111 = sbr.rel (0) target = $region49
    $region48: #{decoder_decode.1} parent=1 // pred_region
      %112 = dma.done [#allocation5], 256
    $region49: #{decoder_decode.1} parent=1 // pred_fallthru
      _
    // Predicated region
    $region50: #{decoder_decode.1} parent=1 // pred_check
      _
    $region51: #{decoder_decode.1} parent=1 // pred_check_branch
      %114 = sbr.rel (0) target = $region53
    $region52: #{decoder_decode.1} parent=1 // pred_region
      %115 = dma.done [#allocation8], 256
    $region53: #{decoder_decode.1} parent=1 // pred_fallthru
      _
    // Predicated region
    $region54: #{decoder_decode.1} parent=1 // pred_check
      _
    $region55: #{decoder_decode.1} parent=1 // pred_check_branch
      %117 = sbr.rel (0) target = $region57
    $region56: #{decoder_decode.1} parent=1 // pred_region
      %118 = dma.done [#allocation8], 256
    $region57: #{decoder_decode.1} parent=1 // pred_fallthru
      _
    // Predicated region
    $region58: #{decoder_decode.1} parent=1 // pred_check
      _
    $region59: #{decoder_decode.1} parent=1 // pred_check_branch
      %120 = sbr.rel (0) target = $region61
    $region60: #{decoder_decode.1} parent=1 // pred_region
      %121 = dma.done [#allocation11], 16
    $region61: #{decoder_decode.1} parent=1 // pred_fallthru
      _
    // Predicated region
    $region62: #{decoder_decode.1} parent=1 // pred_check
      _
    $region63: #{decoder_decode.1} parent=1 // pred_check_branch
      %123 = sbr.rel (0) target = $region65
    $region64: #{decoder_decode.1} parent=1 // pred_region
      %124 = dma.done [#allocation11], 256
    $region65: #{decoder_decode.1} parent=1 // pred_fallthru
      _
    // Predicated region
    $region66: #{decoder_decode.1} parent=1 // pred_check
      _
    $region67: #{decoder_decode.1} parent=1 // pred_check_branch
      %126 = sbr.rel (0) target = $region69
    $region68: #{decoder_decode.1} parent=1 // pred_region
      %127 = dma.done [#allocation14], 16
    $region69: #{decoder_decode.1} parent=1 // pred_fallthru
      _
    %p129 = scmp.eq.s32.totalorder 0, 0
    // Predicated region
    $region70: #{decoder_decode.1} parent=1 // pred_check
      %p130 = pneg %p129
    $region71: #{decoder_decode.1} parent=1 // pred_check_branch
      %132 = sbr.rel (%p130) target = $region73
    $region72: #{decoder_decode.1} parent=1 // pred_region
      %v133 = vld [vmem:[%s1] sm:$0x3]
      %v134 = vld [vmem:[%s1 + $0x2] sm:$0x3]
      %vm135 = vcmask 254976
      %136 = vst.msk [vmem:[#allocation16] sm:$0x3] %vm135, %v133
      %137 = vst.msk [vmem:[#allocation16 + $0x2] sm:$0x3] %vm135, %v134
      %v138 = vld [vmem:[%s2] sm:$0x3]
      %v139 = vld [vmem:[%s2 + $0x2] sm:$0x3]
      %140 = vst.msk [vmem:[#allocation18] sm:$0x3] %vm135, %v138
      %141 = vst.msk [vmem:[#allocation18 + $0x2] sm:$0x3] %vm135, %v139
    $region73: #{decoder_decode.1} parent=1 // pred_fallthru
      _
    %s142 = smul.u32 0, 2
    %s143 = sld [smem:[#allocation3 + %s142]]
    %p144 = scmp.gt.s32.totalorder %s143, 0
    %s145 = scalar_select %p144, %s143, 0
    %p146 = scmp.lt.s32.totalorder %s145, 9
    %s147 = scalar_select %p146, %s145, 9
    %s148 = scalar_lea.vmem [#allocation4], %s147
    %v149 = vld [vmem:[%s148] sm:$0x1]
    %s150 = sadd.s32 %s142, 1
    %s151 = sld [smem:[#allocation3 + %s150]]
    %p152 = scmp.gt.s32.totalorder %s151, 0
    %s153 = scalar_select %p152, %s151, 0
    %p154 = scmp.lt.s32.totalorder %s153, 9
    %s155 = scalar_select %p154, %s153, 9
    %s156 = scalar_lea.vmem [#allocation4], %s155
    %v157 = vld [vmem:[%s156] sm:$0x1]
    %v159 = vrot.slane %v157, 7
    %vm161 = vcmask 1040384
    %v162 = vsel %vm161, %v149, %v159
    %v163 = vpack.c.bf16 %v162, %v162
    %v164 = vld [vmem:[#allocation16] sm:$0x3]
    %v165 = vld [vmem:[#allocation18] sm:$0x3]
    %v166 = vld [vmem:[%s4] sm:$0xf]
    %v167 = vld [vmem:[%s4 + $0x4] sm:$0xf]
    %v168 = vpack.c.bf16 %v164, %v164
    %v169 = vld [vmem:[#allocation7] sm:$0xf]
    %v170 = vld [vmem:[#allocation7 + $0x4] sm:$0xf]
    %v171 = vld [vmem:[#allocation7 + $0x8] sm:$0xf]
    %v172 = vld [vmem:[#allocation7 + $0xc] sm:$0xf]
    %v177 = vunpack.c.l.b16 %v169
    %v178 = vunpack.c.l.b16 %v170
    %v179 = vunpack.c.l.b16 %v171
    %v180 = vunpack.c.l.b16 %v172
    %v181 = vpack.c.b16 %v178, %v177
    %v182 = vpack.c.b16 %v180, %v179
    %vm185 = vcmask 261120
    %v187 = vsel %vm185, %v168, 0
    %189 = vmatprep.subr.bf16.mxu0 0
    %190 = vmatpush1.bf16.msra.mxu0 %v181
    %191 = vmatprep.subr.bf16.mxu0 0
    %192 = vmatpush1.bf16.msra.mxu0 %v182
    %193 = vmatprep.subr.bf16.mxu0 0
    %194 = vmatpush1.bf16.msra.mxu0 0
    %195 = vmatprep.subr.bf16.mxu0 0
    %196 = vmatpush1.bf16.msra.mxu0 0
    %197 = vmatprep.subr.bf16.mxu0 0
    %198 = vmatpush1.bf16.msra.mxu0 0
    %199 = vmatprep.subr.bf16.mxu0 0
    %200 = vmatpush1.bf16.msra.mxu0 0
    %201 = vmatprep.subr.bf16.mxu0 0
    %202 = vmatpush1.bf16.msra.mxu0 0
    %203 = vmatprep.subr.bf16.mxu0 0
    %204 = vmatpush1.bf16.msra.mxu0 0
    %205 = vmatprep.subr.bf16.mxu0 0
    %206 = vmatpush1.bf16.msra.mxu0 0
    %207 = vmatprep.subr.bf16.mxu0 0
    %208 = vmatpush1.bf16.msra.mxu0 0
    %209 = vmatprep.subr.bf16.mxu0 0
    %210 = vmatpush1.bf16.msra.mxu0 0
    %211 = vmatprep.subr.bf16.mxu0 0
    %212 = vmatpush1.bf16.msra.mxu0 0
    %213 = vmatprep.subr.bf16.mxu0 0
    %214 = vmatpush1.bf16.msra.mxu0 0
    %215 = vmatprep.subr.bf16.mxu0 0
    %216 = vmatpush1.bf16.msra.mxu0 0
    %217 = vmatprep.subr.bf16.mxu0 0
    %218 = vmatpush1.bf16.msra.mxu0 0
    %219 = vmatprep.subr.bf16.mxu0 0
    %220 = vmatpush1.bf16.msra.mxu0 0
    %221 = vmatprep.mubr.bf16.mxu0 0
    %222 = vmatmul.mubr.bf16.gmra.mrb[0].mxu0 %v187
    %v223 = vpop.f32.mrb[0].mxu0
    %v224 = vadd.f32 0.0, %v223
    %v225 = vpop.f32.mrb[0].mxu0
    %v226 = vpop.f32.mrb[0].mxu0
    %v227 = vpop.f32.mrb[0].mxu0
    %228 = vdwg.mxu0
    %v231 = vunpack.c.l.b16 %v166
    %v232 = vunpack.c.l.b16 %v167
    %v233 = vpack.c.b16 %v232, %v231
    %vm235 = vcmask 130048
    %v237 = vsel %vm235, %v163, 0
    %239 = vmatprep.subr.bf16.mxu0 0
    %240 = vmatpush1.bf16.msra.mxu0 %v233
    %241 = vmatprep.subr.bf16.mxu0 0
    %242 = vmatpush1.bf16.msra.mxu0 0
    %243 = vmatprep.subr.bf16.mxu0 0
    %244 = vmatpush1.bf16.msra.mxu0 0
    %245 = vmatprep.subr.bf16.mxu0 0
    %246 = vmatpush1.bf16.msra.mxu0 0
    %247 = vmatprep.subr.bf16.mxu0 0
    %248 = vmatpush1.bf16.msra.mxu0 0
    %249 = vmatprep.subr.bf16.mxu0 0
    %250 = vmatpush1.bf16.msra.mxu0 0
    %251 = vmatprep.subr.bf16.mxu0 0
    %252 = vmatpush1.bf16.msra.mxu0 0
    %253 = vmatprep.subr.bf16.mxu0 0
    %254 = vmatpush1.bf16.msra.mxu0 0
    %255 = vmatprep.subr.bf16.mxu0 0
    %256 = vmatpush1.bf16.msra.mxu0 0
    %257 = vmatprep.subr.bf16.mxu0 0
    %258 = vmatpush1.bf16.msra.mxu0 0
    %259 = vmatprep.subr.bf16.mxu0 0
    %260 = vmatpush1.bf16.msra.mxu0 0
    %261 = vmatprep.subr.bf16.mxu0 0
    %262 = vmatpush1.bf16.msra.mxu0 0
    %263 = vmatprep.subr.bf16.mxu0 0
    %264 = vmatpush1.bf16.msra.mxu0 0
    %265 = vmatprep.subr.bf16.mxu0 0
    %266 = vmatpush1.bf16.msra.mxu0 0
    %267 = vmatprep.subr.bf16.mxu0 0
    %268 = vmatpush1.bf16.msra.mxu0 0
    %269 = vmatprep.subr.bf16.mxu0 0
    %270 = vmatpush1.bf16.msra.mxu0 0
    %271 = vmatprep.mubr.bf16.mxu0 0
    %272 = vmatmul.mubr.bf16.gmra.mrb[0].mxu0 %v237
    %v273 = vpop.f32.mrb[0].mxu0
    %v274 = vadd.f32 %v224, %v273
    %v275 = vpop.f32.mrb[0].mxu0
    %v276 = vpop.f32.mrb[0].mxu0
    %v277 = vpop.f32.mrb[0].mxu0
    %278 = vdwg.mxu0
    %v279 = vld [vmem:[%s8] sm:$0x1]
    %v281 = vlaneseq
    %v282 = vshrl.u32 %v281, 7
    %v283 = vsub.s32 0, %v282
    %v284 = vrot.slane %v279, %v283
    %v286 = vadd.f32 %v274, %v284
    %v287 = vlaneseq
    %v288 = vand.u32 %v287, 127
    %vm289 = vcmp.ge.s32.totalorder %v288, 64
    %vm290 = vcmp.lt.s32.totalorder %v288, 96
    %vm291 = vmand %vm289, %vm290
    %v292 = vmul.f32 %v286, 0.5
    %v293 = vsel %vm291, %v286, %v292
    %v294 = vtanh.pop %v293
    %v295 = vmul.f32 %v294, 0.5
    %v296 = vadd.f32 %v295, 0.5
    %v297 = vsel %vm291, %v294, %v296
    %299 = vrot.lane.b32.xlu0 %v165, 32
    %v300 = vpop.permute.xlu0 %299
    %v302 = vmul.f32 %v297, %v300
    %304 = vrot.lane.b32.xlu0 %v297, 64
    %v305 = vpop.permute.xlu0 %304
    %v307 = vmul.f32 %v297, %v305
    %309 = vrot.lane.b32.xlu0 %v307, 32
    %v310 = vpop.permute.xlu0 %309
    %v312 = vadd.f32 %v302, %v310
    %v313 = vtanh.pop %v312
    %315 = vrot.lane.b32.xlu0 %v313, 64
    %v316 = vpop.permute.xlu0 %315
    %v318 = vmul.f32 %v297, %v316
    %320 = vrot.lane.b32.xlu0 %v318, 32
    %v321 = vpop.permute.xlu0 %320
    %vm323 = vcmask 254976
    %324 = vst.msk [vmem:[#allocation16] sm:$0x3] %vm323, %v321
    %326 = vrot.lane.b32.xlu0 %v312, 96
    %v327 = vpop.permute.xlu0 %326
    %329 = vst.msk [vmem:[#allocation18] sm:$0x3] %vm323, %v327
    %v330 = vpack.c.bf16 %v318, %v318
    %s331 = scalar_lea.vmem [#allocation16], 2
    %v332 = vld [vmem:[%s331] sm:$0x3]
    %s333 = scalar_lea.vmem [#allocation18], 2
    %v334 = vld [vmem:[%s333] sm:$0x3]
    %v335 = vld [vmem:[%s5] sm:$0xf]
    %v336 = vld [vmem:[%s5 + $0x4] sm:$0xf]
    %v337 = vld [vmem:[%s5 + $0x8] sm:$0xf]
    %v338 = vld [vmem:[%s5 + $0xc] sm:$0xf]
    %v339 = vpack.c.bf16 %v332, %v332
    %v340 = vld [vmem:[#allocation9] sm:$0xf]
    %v341 = vld [vmem:[#allocation9 + $0x4] sm:$0xf]
    %v342 = vld [vmem:[#allocation9 + $0x8] sm:$0xf]
    %v343 = vld [vmem:[#allocation9 + $0xc] sm:$0xf]
    %v348 = vunpack.c.l.b16 %v340
    %v349 = vunpack.c.l.b16 %v341
    %v350 = vunpack.c.l.b16 %v342
    %v351 = vunpack.c.l.b16 %v343
    %v352 = vpack.c.b16 %v349, %v348
    %v353 = vpack.c.b16 %v351, %v350
    %v357 = vsel %vm185, %v339, 0
    %359 = vmatprep.subr.bf16.mxu0 0
    %360 = vmatpush1.bf16.msra.mxu0 %v352
    %361 = vmatprep.subr.bf16.mxu0 0
    %362 = vmatpush1.bf16.msra.mxu0 %v353
    %363 = vmatprep.subr.bf16.mxu0 0
    %364 = vmatpush1.bf16.msra.mxu0 0
    %365 = vmatprep.subr.bf16.mxu0 0
    %366 = vmatpush1.bf16.msra.mxu0 0
    %367 = vmatprep.subr.bf16.mxu0 0
    %368 = vmatpush1.bf16.msra.mxu0 0
    %369 = vmatprep.subr.bf16.mxu0 0
    %370 = vmatpush1.bf16.msra.mxu0 0
    %371 = vmatprep.subr.bf16.mxu0 0
    %372 = vmatpush1.bf16.msra.mxu0 0
    %373 = vmatprep.subr.bf16.mxu0 0
    %374 = vmatpush1.bf16.msra.mxu0 0
    %375 = vmatprep.subr.bf16.mxu0 0
    %376 = vmatpush1.bf16.msra.mxu0 0
    %377 = vmatprep.subr.bf16.mxu0 0
    %378 = vmatpush1.bf16.msra.mxu0 0
    %379 = vmatprep.subr.bf16.mxu0 0
    %380 = vmatpush1.bf16.msra.mxu0 0
    %381 = vmatprep.subr.bf16.mxu0 0
    %382 = vmatpush1.bf16.msra.mxu0 0
    %383 = vmatprep.subr.bf16.mxu0 0
    %384 = vmatpush1.bf16.msra.mxu0 0
    %385 = vmatprep.subr.bf16.mxu0 0
    %386 = vmatpush1.bf16.msra.mxu0 0
    %387 = vmatprep.subr.bf16.mxu0 0
    %388 = vmatpush1.bf16.msra.mxu0 0
    %389 = vmatprep.subr.bf16.mxu0 0
    %390 = vmatpush1.bf16.msra.mxu0 0
    %391 = vmatprep.mubr.bf16.mxu0 0
    %392 = vmatmul.mubr.bf16.gmra.mrb[0].mxu0 %v357
    %v393 = vpop.f32.mrb[0].mxu0
    %v394 = vadd.f32 0.0, %v393
    %v395 = vpop.f32.mrb[0].mxu0
    %v396 = vpop.f32.mrb[0].mxu0
    %v397 = vpop.f32.mrb[0].mxu0
    %398 = vdwg.mxu0
    %400 = vrot.lane.b32.xlu0 %v330, 32
    %v401 = vpop.permute.xlu0 %400
    %v406 = vunpack.c.l.b16 %v335
    %v407 = vunpack.c.l.b16 %v336
    %v408 = vunpack.c.l.b16 %v337
    %v409 = vunpack.c.l.b16 %v338
    %v410 = vpack.c.b16 %v407, %v406
    %v411 = vpack.c.b16 %v409, %v408
    %v415 = vsel %vm185, %v401, 0
    %417 = vmatprep.subr.bf16.mxu0 0
    %418 = vmatpush1.bf16.msra.mxu0 %v410
    %419 = vmatprep.subr.bf16.mxu0 0
    %420 = vmatpush1.bf16.msra.mxu0 %v411
    %421 = vmatprep.subr.bf16.mxu0 0
    %422 = vmatpush1.bf16.msra.mxu0 0
    %423 = vmatprep.subr.bf16.mxu0 0
    %424 = vmatpush1.bf16.msra.mxu0 0
    %425 = vmatprep.subr.bf16.mxu0 0
    %426 = vmatpush1.bf16.msra.mxu0 0
    %427 = vmatprep.subr.bf16.mxu0 0
    %428 = vmatpush1.bf16.msra.mxu0 0
    %429 = vmatprep.subr.bf16.mxu0 0
    %430 = vmatpush1.bf16.msra.mxu0 0
    %431 = vmatprep.subr.bf16.mxu0 0
    %432 = vmatpush1.bf16.msra.mxu0 0
    %433 = vmatprep.subr.bf16.mxu0 0
    %434 = vmatpush1.bf16.msra.mxu0 0
    %435 = vmatprep.subr.bf16.mxu0 0
    %436 = vmatpush1.bf16.msra.mxu0 0
    %437 = vmatprep.subr.bf16.mxu0 0
    %438 = vmatpush1.bf16.msra.mxu0 0
    %439 = vmatprep.subr.bf16.mxu0 0
    %440 = vmatpush1.bf16.msra.mxu0 0
    %441 = vmatprep.subr.bf16.mxu0 0
    %442 = vmatpush1.bf16.msra.mxu0 0
    %443 = vmatprep.subr.bf16.mxu0 0
    %444 = vmatpush1.bf16.msra.mxu0 0
    %445 = vmatprep.subr.bf16.mxu0 0
    %446 = vmatpush1.bf16.msra.mxu0 0
    %447 = vmatprep.subr.bf16.mxu0 0
    %448 = vmatpush1.bf16.msra.mxu0 0
    %449 = vmatprep.mubr.bf16.mxu0 0
    %450 = vmatmul.mubr.bf16.gmra.mrb[0].mxu0 %v415
    %v451 = vpop.f32.mrb[0].mxu0
    %v452 = vadd.f32 %v394, %v451
    %v453 = vpop.f32.mrb[0].mxu0
    %v454 = vpop.f32.mrb[0].mxu0
    %v455 = vpop.f32.mrb[0].mxu0
    %456 = vdwg.mxu0
    %v457 = vld [vmem:[#allocation10] sm:$0x1]
    %v459 = vlaneseq
    %v460 = vshrl.u32 %v459, 7
    %v461 = vsub.s32 0, %v460
    %v462 = vrot.slane %v457, %v461
    %v464 = vadd.f32 %v452, %v462
    %v465 = vmul.f32 %v464, 0.5
    %v466 = vsel %vm291, %v464, %v465
    %v467 = vtanh.pop %v466
    %v468 = vmul.f32 %v467, 0.5
    %v469 = vadd.f32 %v468, 0.5
    %v470 = vsel %vm291, %v467, %v469
    %472 = vrot.lane.b32.xlu0 %v334, 32
    %v473 = vpop.permute.xlu0 %472
    %v475 = vmul.f32 %v470, %v473
    %477 = vrot.lane.b32.xlu0 %v470, 64
    %v478 = vpop.permute.xlu0 %477
    %v480 = vmul.f32 %v470, %v478
    %482 = vrot.lane.b32.xlu0 %v480, 32
    %v483 = vpop.permute.xlu0 %482
    %v485 = vadd.f32 %v475, %v483
    %v486 = vtanh.pop %v485
    %488 = vrot.lane.b32.xlu0 %v486, 64
    %v489 = vpop.permute.xlu0 %488
    %v491 = vmul.f32 %v470, %v489
    %493 = vrot.lane.b32.xlu0 %v491, 32
    %v494 = vpop.permute.xlu0 %493
    %496 = vst.msk [vmem:[%s331] sm:$0x3] %vm323, %v494
    %498 = vrot.lane.b32.xlu0 %v485, 96
    %v499 = vpop.permute.xlu0 %498
    %501 = vst.msk [vmem:[%s333] sm:$0x3] %vm323, %v499
    %v502 = vpack.c.bf16 %v491, %v491
    %v503 = vld [vmem:[#allocation12] sm:$0xf]
    %v504 = vld [vmem:[#allocation12 + $0x4] sm:$0xf]
    %v505 = vld [vmem:[#allocation12 + $0x8] sm:$0xf]
    %v506 = vld [vmem:[#allocation12 + $0xc] sm:$0xf]
    %v507 = vld [vmem:[#allocation13] sm:$0x1]
    %v509 = vlaneseq
    %v510 = vshrl.u32 %v509, 7
    %v511 = vsub.s32 0, %v510
    %v512 = vrot.slane %v507, %v511
    %515 = vrot.lane.b32.xlu0 %v502, 32
    %v516 = vpop.permute.xlu0 %515
    %v521 = vunpack.c.l.b16 %v503
    %v522 = vunpack.c.l.b16 %v504
    %v523 = vunpack.c.l.b16 %v505
    %v524 = vunpack.c.l.b16 %v506
    %v525 = vpack.c.b16 %v522, %v521
    %v526 = vpack.c.b16 %v524, %v523
    %v530 = vsel %vm185, %v516, 0
    %532 = vmatprep.subr.bf16.mxu0 0
    %533 = vmatpush1.bf16.msra.mxu0 %v525
    %534 = vmatprep.subr.bf16.mxu0 0
    %535 = vmatpush1.bf16.msra.mxu0 %v526
    %536 = vmatprep.subr.bf16.mxu0 0
    %537 = vmatpush1.bf16.msra.mxu0 0
    %538 = vmatprep.subr.bf16.mxu0 0
    %539 = vmatpush1.bf16.msra.mxu0 0
    %540 = vmatprep.subr.bf16.mxu0 0
    %541 = vmatpush1.bf16.msra.mxu0 0
    %542 = vmatprep.subr.bf16.mxu0 0
    %543 = vmatpush1.bf16.msra.mxu0 0
    %544 = vmatprep.subr.bf16.mxu0 0
    %545 = vmatpush1.bf16.msra.mxu0 0
    %546 = vmatprep.subr.bf16.mxu0 0
    %547 = vmatpush1.bf16.msra.mxu0 0
    %548 = vmatprep.subr.bf16.mxu0 0
    %549 = vmatpush1.bf16.msra.mxu0 0
    %550 = vmatprep.subr.bf16.mxu0 0
    %551 = vmatpush1.bf16.msra.mxu0 0
    %552 = vmatprep.subr.bf16.mxu0 0
    %553 = vmatpush1.bf16.msra.mxu0 0
    %554 = vmatprep.subr.bf16.mxu0 0
    %555 = vmatpush1.bf16.msra.mxu0 0
    %556 = vmatprep.subr.bf16.mxu0 0
    %557 = vmatpush1.bf16.msra.mxu0 0
    %558 = vmatprep.subr.bf16.mxu0 0
    %559 = vmatpush1.bf16.msra.mxu0 0
    %560 = vmatprep.subr.bf16.mxu0 0
    %561 = vmatpush1.bf16.msra.mxu0 0
    %562 = vmatprep.subr.bf16.mxu0 0
    %563 = vmatpush1.bf16.msra.mxu0 0
    %564 = vmatprep.mubr.bf16.mxu0 0
    %565 = vmatmul.mubr.bf16.gmra.mrb[0].mxu0 %v530
    %v566 = vpop.f32.mrb[0].mxu0
    %v567 = vadd.f32 %v512, %v566
    %v568 = vpop.f32.mrb[0].mxu0
    %v569 = vpop.f32.mrb[0].mxu0
    %v570 = vpop.f32.mrb[0].mxu0
    %571 = vdwg.mxu0
    %572 = vst [vmem:[#allocation15] sm:$0x3] %v567
    // Predicated region
    $region74: #{decoder_decode.1} parent=1 // pred_check
      _
    $region75: #{decoder_decode.1} parent=1 // pred_check_branch
      %574 = sbr.rel (0) target = $region77
    $region76: #{decoder_decode.1} parent=1 // pred_region
      %s576 = ssub.s32 32, 32
      %577 = vsyncadd [#allocation6], %s576
      %s579 = sshll.u32 [#allocation15], 4
      %s580 = int_to_ptr.vmem [resolvable:$true] %s579
      %582 = dma.vmem_to_hbm [thread:$0]  %s580, 32, %s12, [#allocation6]
    $region77: #{decoder_decode.1} parent=1 // pred_fallthru
      _
    // Predicated region
    $region78: #{decoder_decode.1} parent=1 // pred_check
      _
    $region79: #{decoder_decode.1} parent=1 // pred_check_branch
      %584 = sbr.rel (0) target = $region81
    $region80: #{decoder_decode.1} parent=1 // pred_region
      %s586 = ssub.s32 64, 64
      %587 = vsyncadd [#allocation17], %s586
      %s588 = sshll.u32 [#allocation16], 4
      %s589 = int_to_ptr.vmem [resolvable:$true] %s588
      %594 = dma.vmem_to_hbm [thread:$0]  %s589, 64, %s13, [#allocation17], 32, 32, 2
    $region81: #{decoder_decode.1} parent=1 // pred_fallthru
      _
    // Predicated region
    $region82: #{decoder_decode.1} parent=1 // pred_check
      _
    $region83: #{decoder_decode.1} parent=1 // pred_check_branch
      %596 = sbr.rel (0) target = $region85
    $region84: #{decoder_decode.1} parent=1 // pred_region
      %s598 = ssub.s32 64, 64
      %599 = vsyncadd [#allocation17], %s598
      %s600 = sshll.u32 [#allocation18], 4
      %s601 = int_to_ptr.vmem [resolvable:$true] %s600
      %606 = dma.vmem_to_hbm [thread:$0]  %s601, 64, %s14, [#allocation17], 32, 32, 2
    $region85: #{decoder_decode.1} parent=1 // pred_fallthru
      _
    // Predicated region
    $region86: #{decoder_decode.1} parent=1 // pred_check
      _
    $region87: #{decoder_decode.1} parent=1 // pred_check_branch
      %608 = sbr.rel (0) target = $region89
    $region88: #{decoder_decode.1} parent=1 // pred_region
      %609 = dma.done [#allocation6], 32
    $region89: #{decoder_decode.1} parent=1 // pred_fallthru
      _
    // Predicated region
    $region90: #{decoder_decode.1} parent=1 // pred_check
      _
    $region91: #{decoder_decode.1} parent=1 // pred_check_branch
      %611 = sbr.rel (0) target = $region93
    $region92: #{decoder_decode.1} parent=1 // pred_region
      %612 = dma.done [#allocation17], 64
    $region93: #{decoder_decode.1} parent=1 // pred_fallthru
      _
    // Predicated region
    $region94: #{decoder_decode.1} parent=1 // pred_check
      _
    $region95: #{decoder_decode.1} parent=1 // pred_check_branch
      %614 = sbr.rel (0) target = $region97
    $region96: #{decoder_decode.1} parent=1 // pred_region
      %615 = dma.done [#allocation17], 64
    $region97: #{decoder_decode.1} parent=1 // pred_fallthru
      _
    %616 = vsyncpa [#allocation5], 1
    %617 = vsyncpa [#allocation8], 1
    %618 = vsyncpa [#allocation11], 1
    %619 = vsyncpa [#allocation14], 1
    %620 = vsyncpa [#allocation6], 1
    %621 = vsyncpa [#allocation17], 1

</llo_original>
